<compile_context>
chip_gen: v5e
topology: v5e:2x2
jax: 0.10.0
libtpu: 0.0.40
codegen_flags: <defaults>
</compile_context>

<pallas_src>
import jax
import jax.numpy as jnp
from jax import lax
from jax.experimental import pallas as pl
from jax.experimental.pallas import tpu as pltpu


def _round_up(v, m):
    return -(-v // m) * m


def _round_down(v, m):
    return (v // m) * m


def _default_budgets():
    """(target x-block bytes, vmem_limit_bytes) tuned per TPU generation."""
    try:
        kind = jax.devices()[0].device_kind.lower()
    except Exception:
        kind = ""
    if "v5" in kind or "v6" in kind:
        # 128 MiB VMEM parts: larger blocks, raised scoped limit.
        return 16 * 1024 * 1024, 96 * 1024 * 1024
    # v7x (64 MiB VMEM per TC) and unknown parts: conservative, still past the
    # measured ~85%-of-roofline knee (~1-4 MiB per transfer).
    return 8 * 1024 * 1024, 48 * 1024 * 1024


def _pick_tiles(B, S, D, itemsize, target_block_bytes):
    """Pick (block_b, block_s) so the (TB, TS, D) x-block ~= target bytes."""
    row_bytes = max(1, D * itemsize)                        # one (1, 1, D) slice
    budget_rows = max(8, target_block_bytes // row_bytes)   # TB * TS rows
    if 8 * S <= budget_rows:
        ts = S                                              # whole sequence per step
        tb = max(8, _round_down(budget_rows // S, 8))
    else:
        tb = 8                                              # long sequence: tile S
        ts = max(8, _round_down(budget_rows // 8, 8))
    if B < 8:
        tb = B                                              # full-dim block is always legal
    else:
        tb = min(tb, max(8, _round_down(B, 8)))             # never exceed the batch
        # Megacore: keep >= 4 batch-grid steps when there is enough batch so the
        # "parallel" axis can be sharded across TensorCores (v7x has 2 TCs).
        if B >= 32 and -(-B // tb) < 4:
            tb = max(8, _round_up(-(-B // 4), 8))
    return tb, ts


def _make_kernel(seq_len, block_s):
    mask_seq = (seq_len % block_s) != 0

    def kernel(q_ref, x_ref, o_ref, m_sc, l_sc, acc_sc):
        # q_ref: (1, 1, D)  x_ref: (TB, TS, D)  o_ref: (TB, D)
        # m_sc/l_sc: (TB, 1, 1) f32   acc_sc: (TB, 1, D) f32
        j = pl.program_id(1)

        @pl.when(j == 0)
        def _():
            m_sc[...] = jnp.full(m_sc.shape, -jnp.inf, dtype=m_sc.dtype)
            l_sc[...] = jnp.zeros(l_sc.shape, dtype=l_sc.dtype)
            acc_sc[...] = jnp.zeros(acc_sc.shape, dtype=acc_sc.dtype)

        x = x_ref[...]                                   # (TB, TS, D)
        tb, ts, d = x.shape
        q = jnp.broadcast_to(q_ref[...], (tb, 1, d))     # (TB, 1, D)

        if mask_seq:
            # Trailing partial S block: zero the out-of-range rows of x so no
            # garbage (possibly NaN/Inf) feeds the MXU contractions.
            pos = j * block_s + lax.broadcasted_iota(jnp.int32, (1, ts, 1), 1)
            x = jnp.where(pos < seq_len, x, jnp.zeros((), dtype=x.dtype))

        # scores on the MXU: per batch row (1, D) . (TS, D)^T -> (TB, 1, TS),
        # f32 accumulation, lane-dense in TS for the softmax reductions.
        s = jnp.einsum("bqd,bkd->bqk", q, x,
                       preferred_element_type=jnp.float32)

        if mask_seq:
            kpos = j * block_s + lax.broadcasted_iota(jnp.int32, (1, 1, ts), 2)
            s = jnp.where(kpos < seq_len, s, -jnp.inf)   # exclude padded positions

        # Online (streaming) softmax update over the S-tiled grid axis.
        m_prev = m_sc[...]
        m_new = jnp.maximum(m_prev, jnp.max(s, axis=-1, keepdims=True))  # (TB,1,1)
        alpha = jnp.exp(m_prev - m_new)                                  # (TB,1,1)
        p = jnp.exp(s - m_new)                                           # (TB,1,TS)
        l_sc[...] = alpha * l_sc[...] + jnp.sum(p, axis=-1, keepdims=True)

        # Weighted sum on the MXU: (1, TS) . (TS, D) per batch row -> (TB,1,D).
        pv = jnp.einsum("bqk,bkd->bqd", p.astype(x.dtype), x,
                        preferred_element_type=jnp.float32)
        acc_sc[...] = alpha * acc_sc[...] + pv
        m_sc[...] = m_new

        @pl.when(j == pl.num_programs(1) - 1)
        def _():
            inv = pl.reciprocal(l_sc[...], approx=False)                 # (TB,1,1)
            o_ref[...] = (acc_sc[...] * inv)[:, 0, :].astype(o_ref.dtype)

    return kernel


def simple_attention_pool(x, query, *, block_b=None, block_s=None,
                          target_block_bytes=None, vmem_limit_bytes=None):
    """x: (B, S, D), query: (D,) -> (B, D). Matches SimpleAttentionPool.forward."""
    B, S, D = x.shape
    query = query.astype(x.dtype).reshape(1, 1, D)

    default_target, default_limit = _default_budgets()
    if target_block_bytes is None:
        target_block_bytes = default_target
    if vmem_limit_bytes is None:
        vmem_limit_bytes = default_limit

    tb, ts = _pick_tiles(B, S, D, x.dtype.itemsize, target_block_bytes)
    if block_b is not None:
        tb = block_b
    if block_s is not None:
        ts = block_s
    assert tb == B or tb % 8 == 0, "block_b must be a multiple of 8 or equal B"
    assert ts == S or ts % 8 == 0, "block_s must be a multiple of 8 or equal S"

    n_b = -(-B // tb)
    n_s = -(-S // ts)

    kernel = _make_kernel(S, ts)

    out = pl.pallas_call(
        kernel,
        out_shape=jax.ShapeDtypeStruct((B, D), x.dtype),
        grid_spec=pltpu.PrefetchScalarGridSpec(
            num_scalar_prefetch=0,
            grid=(n_b, n_s),
            in_specs=[
                pl.BlockSpec((1, 1, D), lambda i, j: (0, 0, 0)),     # shared query
                pl.BlockSpec((tb, ts, D), lambda i, j: (i, j, 0)),   # x tile
            ],
            out_specs=pl.BlockSpec((tb, D), lambda i, j: (i, 0)),
            scratch_shapes=[
                pltpu.VMEM((tb, 1, 1), jnp.float32),   # running max
                pltpu.VMEM((tb, 1, 1), jnp.float32),   # running denom
                pltpu.VMEM((tb, 1, D), jnp.float32),   # running weighted sum
            ],
        ),
        compiler_params=pltpu.CompilerParams(
            dimension_semantics=("parallel", "arbitrary"),
            vmem_limit_bytes=vmem_limit_bytes,
        ),
    )(query, x)
    return out


def _reference(x, query):
    scores = jnp.einsum("bsd,d->bs", x, query)
    weights = jax.nn.softmax(scores, axis=1)
    return jnp.sum(weights[..., None] * x, axis=1)


if __name__ == "__main__":
    key = jax.random.PRNGKey(0)
    kx, kq = jax.random.split(key)

    # Test 1: module-scale shapes, default (auto) tiling; B < TB exercises the
    # full-dim batch block.
    B, S, D = 2, 8, 32
    x = jax.random.normal(kx, (B, S, D), dtype=jnp.float32)
    query = jax.random.normal(kq, (D,), dtype=jnp.float32)
    out = jax.block_until_ready(simple_attention_pool(x, query))
    ref = _reference(x, query)
    assert out.shape == (B, D)
    assert jnp.allclose(out, ref, atol=1e-4, rtol=1e-4), "test1 mismatch"

    # Test 2: multi-step batch grid (trailing partial block, masked store) plus
    # a 3-step S grid exercising the online-softmax accumulator path.
    k1, k2 = jax.random.split(kq)
    B2, S2, D2 = 9, 24, 32
    x2 = jax.random.normal(k1, (B2, S2, D2), dtype=jnp.float32)
    q2 = jax.random.normal(k2, (D2,), dtype=jnp.float32)
    out2 = jax.block_until_ready(simple_attention_pool(x2, q2, block_b=8, block_s=8))
    ref2 = _reference(x2, q2)
    assert jnp.allclose(out2, ref2, atol=1e-4, rtol=1e-4), "test2 mismatch"

    # Test 3: ragged sequence (S % block_s != 0) exercises the in-kernel
    # sequence masking of the partial trailing S block.
    k3, k4 = jax.random.split(k1)
    B3, S3, D3 = 4, 13, 32
    x3 = jax.random.normal(k3, (B3, S3, D3), dtype=jnp.float32)
    q3 = jax.random.normal(k4, (D3,), dtype=jnp.float32)
    out3 = jax.block_until_ready(simple_attention_pool(x3, q3, block_s=8))
    ref3 = _reference(x3, q3)
    assert jnp.allclose(out3, ref3, atol=1e-4, rtol=1e-4), "test3 mismatch"

    print("KERNEL_OK")
</pallas_src>

<mosaic_0001>
module attributes {stable_mosaic.version = 11 : i64} {
  func.func @kernel(%arg0: i32, %arg1: i32, %arg2: memref<1x1x32xf32, #tpu.memory_space<vmem>>, %arg3: memref<2x8x32xf32, #tpu.memory_space<vmem>>, %arg4: memref<2x32xf32, #tpu.memory_space<vmem>>, %arg5: memref<2x1x1xf32, #tpu.memory_space<vmem>>, %arg6: memref<2x1x1xf32, #tpu.memory_space<vmem>>, %arg7: memref<2x1x32xf32, #tpu.memory_space<vmem>>) attributes {dimension_semantics = [#tpu.dimension_semantics<parallel>, #tpu.dimension_semantics<arbitrary>], iteration_bounds = array<i64: 1, 1>, scalar_prefetch = 0 : i64, scratch_operands = 3 : i64, tpu.core_type = #tpu.core_type<tc>, window_params = [{pipeline_mode = #tpu.pipeline_mode<synchronous>, transform_indices = @transform_0, window_bounds = array<i64: 1, 1, 32>}, {transform_indices = @transform_1, window_bounds = array<i64: 2, 8, 32>}, {transform_indices = @transform_2, window_bounds = array<i64: 2, 32>}]} {
    %c0_i32 = arith.constant 0 : i32
    %0 = arith.cmpi eq, %arg1, %c0_i32 : i32
    %1 = arith.extui %0 : i1 to i32
    %c0_i32_0 = arith.constant 0 : i32
    %2 = arith.cmpi ne, %1, %c0_i32_0 : i32
    scf.if %2 {
      %cst_29 = arith.constant 0xFF800000 : f32
      %33 = vector.broadcast %cst_29 : f32 to vector<2x1x1xf32>
      %c0_30 = arith.constant 0 : index
      %c0_31 = arith.constant 0 : index
      %c0_32 = arith.constant 0 : index
      %34 = vector.load %arg5[%c0_30, %c0_31, %c0_32] : memref<2x1x1xf32, #tpu.memory_space<vmem>>, vector<2x1x1xf32>
      tpu.vector_store %arg5[%c0_30, %c0_31, %c0_32], %33 {strides = array<i32>} : memref<2x1x1xf32, #tpu.memory_space<vmem>>, vector<2x1x1xf32>,
      %cst_33 = arith.constant 0.000000e+00 : f32
      %35 = vector.broadcast %cst_33 : f32 to vector<2x1x1xf32>
      %c0_34 = arith.constant 0 : index
      %c0_35 = arith.constant 0 : index
      %c0_36 = arith.constant 0 : index
      %36 = vector.load %arg6[%c0_34, %c0_35, %c0_36] : memref<2x1x1xf32, #tpu.memory_space<vmem>>, vector<2x1x1xf32>
      tpu.vector_store %arg6[%c0_34, %c0_35, %c0_36], %35 {strides = array<i32>} : memref<2x1x1xf32, #tpu.memory_space<vmem>>, vector<2x1x1xf32>,
      %cst_37 = arith.constant 0.000000e+00 : f32
      %37 = vector.broadcast %cst_37 : f32 to vector<2x1x32xf32>
      %c0_38 = arith.constant 0 : index
      %c0_39 = arith.constant 0 : index
      %c0_40 = arith.constant 0 : index
      %38 = vector.load %arg7[%c0_38, %c0_39, %c0_40] : memref<2x1x32xf32, #tpu.memory_space<vmem>>, vector<2x1x32xf32>
      tpu.vector_store %arg7[%c0_38, %c0_39, %c0_40], %37 {strides = array<i32>} : memref<2x1x32xf32, #tpu.memory_space<vmem>>, vector<2x1x32xf32>,
    } else {
    }
    %c0 = arith.constant 0 : index
    %c0_1 = arith.constant 0 : index
    %c0_2 = arith.constant 0 : index
    %3 = vector.load %arg3[%c0, %c0_1, %c0_2] : memref<2x8x32xf32, #tpu.memory_space<vmem>>, vector<2x8x32xf32>
    %c0_3 = arith.constant 0 : index
    %c0_4 = arith.constant 0 : index
    %c0_5 = arith.constant 0 : index
    %4 = vector.load %arg2[%c0_3, %c0_4, %c0_5] : memref<1x1x32xf32, #tpu.memory_space<vmem>>, vector<1x1x32xf32>
    %5 = vector.shape_cast %4 : vector<1x1x32xf32> to vector<1x1x32xf32>
    %6 = vector.broadcast %5 : vector<1x1x32xf32> to vector<2x1x32xf32>
    "tpu.trace_start"() <{level = 10 : i32, message = "bqd,bkd->bqk"}> : () -> ()
    %cst = arith.constant dense<0.000000e+00> : vector<2x1x8xf32>
    %7 = tpu.matmul %6, %3, %cst {dimension_numbers = #tpu.dot_dimension_numbers<[2], [2], [1], [1], [0, 0, 0, 1, 1, 1], [0], [0]>} : vector<2x1x32xf32>, vector<2x8x32xf32>, vector<2x1x8xf32> -> vector<2x1x8xf32>
    "tpu.trace_stop"() : () -> ()
    %c0_6 = arith.constant 0 : index
    %c0_7 = arith.constant 0 : index
    %c0_8 = arith.constant 0 : index
    %8 = vector.load %arg5[%c0_6, %c0_7, %c0_8] : memref<2x1x1xf32, #tpu.memory_space<vmem>>, vector<2x1x1xf32>
    %cst_9 = arith.constant dense<0xFF800000> : vector<2x1xf32>
    %9 = vector.multi_reduction <maximumf>, %7, %cst_9 [2] : vector<2x1x8xf32> to vector<2x1xf32>
    %10 = vector.shape_cast %9 : vector<2x1xf32> to vector<2x1x1xf32>
    %11 = arith.maximumf %8, %10 : vector<2x1x1xf32>
    %12 = arith.subf %8, %11 : vector<2x1x1xf32>
    %13 = math.exp %12 : vector<2x1x1xf32>
    %14 = vector.broadcast %11 : vector<2x1x1xf32> to vector<2x1x8xf32>
    %15 = arith.subf %7, %14 : vector<2x1x8xf32>
    %16 = math.exp %15 : vector<2x1x8xf32>
    %c0_10 = arith.constant 0 : index
    %c0_11 = arith.constant 0 : index
    %c0_12 = arith.constant 0 : index
    %17 = vector.load %arg6[%c0_10, %c0_11, %c0_12] : memref<2x1x1xf32, #tpu.memory_space<vmem>>, vector<2x1x1xf32>
    %18 = arith.mulf %13, %17 : vector<2x1x1xf32>
    %cst_13 = arith.constant dense<0.000000e+00> : vector<2x1xf32>
    %19 = vector.multi_reduction <add>, %16, %cst_13 [2] : vector<2x1x8xf32> to vector<2x1xf32>
    %20 = vector.shape_cast %19 : vector<2x1xf32> to vector<2x1x1xf32>
    %21 = arith.addf %18, %20 : vector<2x1x1xf32>
    %c0_14 = arith.constant 0 : index
    %c0_15 = arith.constant 0 : index
    %c0_16 = arith.constant 0 : index
    %22 = vector.load %arg6[%c0_14, %c0_15, %c0_16] : memref<2x1x1xf32, #tpu.memory_space<vmem>>, vector<2x1x1xf32>
    tpu.vector_store %arg6[%c0_14, %c0_15, %c0_16], %21 {strides = array<i32>} : memref<2x1x1xf32, #tpu.memory_space<vmem>>, vector<2x1x1xf32>,
    "tpu.trace_start"() <{level = 10 : i32, message = "bqk,bkd->bqd"}> : () -> ()
    %cst_17 = arith.constant dense<0.000000e+00> : vector<2x1x32xf32>
    %23 = tpu.matmul %16, %3, %cst_17 {dimension_numbers = #tpu.dot_dimension_numbers<[2], [1], [1], [2], [0, 0, 0, 1, 1, 2], [0], [0]>} : vector<2x1x8xf32>, vector<2x8x32xf32>, vector<2x1x32xf32> -> vector<2x1x32xf32>
    "tpu.trace_stop"() : () -> ()
    %c0_18 = arith.constant 0 : index
    %c0_19 = arith.constant 0 : index
    %c0_20 = arith.constant 0 : index
    %24 = vector.load %arg7[%c0_18, %c0_19, %c0_20] : memref<2x1x32xf32, #tpu.memory_space<vmem>>, vector<2x1x32xf32>
    %25 = vector.broadcast %13 : vector<2x1x1xf32> to vector<2x1x32xf32>
    %26 = arith.mulf %25, %24 : vector<2x1x32xf32>
    %27 = arith.addf %26, %23 : vector<2x1x32xf32>
    %c0_21 = arith.constant 0 : index
    %c0_22 = arith.constant 0 : index
    %c0_23 = arith.constant 0 : index
    %28 = vector.load %arg7[%c0_21, %c0_22, %c0_23] : memref<2x1x32xf32, #tpu.memory_space<vmem>>, vector<2x1x32xf32>
    tpu.vector_store %arg7[%c0_21, %c0_22, %c0_23], %27 {strides = array<i32>} : memref<2x1x32xf32, #tpu.memory_space<vmem>>, vector<2x1x32xf32>,
    %c0_24 = arith.constant 0 : index
    %c0_25 = arith.constant 0 : index
    %c0_26 = arith.constant 0 : index
    %29 = vector.load %arg5[%c0_24, %c0_25, %c0_26] : memref<2x1x1xf32, #tpu.memory_space<vmem>>, vector<2x1x1xf32>
    tpu.vector_store %arg5[%c0_24, %c0_25, %c0_26], %11 {strides = array<i32>} : memref<2x1x1xf32, #tpu.memory_space<vmem>>, vector<2x1x1xf32>,
    %c0_i32_27 = arith.constant 0 : i32
    %30 = arith.cmpi eq, %arg1, %c0_i32_27 : i32
    %31 = arith.extui %30 : i1 to i32
    %c0_i32_28 = arith.constant 0 : i32
    %32 = arith.cmpi ne, %31, %c0_i32_28 : i32
    scf.if %32 {
      %c0_29 = arith.constant 0 : index
      %c0_30 = arith.constant 0 : index
      %c0_31 = arith.constant 0 : index
      %33 = vector.load %arg6[%c0_29, %c0_30, %c0_31] : memref<2x1x1xf32, #tpu.memory_space<vmem>>, vector<2x1x1xf32>
      %34 = tpu.reciprocal %33 : vector<2x1x1xf32> -> vector<2x1x1xf32>
      %c0_32 = arith.constant 0 : index
      %c0_33 = arith.constant 0 : index
      %c0_34 = arith.constant 0 : index
      %35 = vector.load %arg7[%c0_32, %c0_33, %c0_34] : memref<2x1x32xf32, #tpu.memory_space<vmem>>, vector<2x1x32xf32>
      %36 = vector.broadcast %34 : vector<2x1x1xf32> to vector<2x1x32xf32>
      %37 = arith.mulf %35, %36 : vector<2x1x32xf32>
      %38 = vector.shape_cast %37 : vector<2x1x32xf32> to vector<2x32xf32>
      %c0_35 = arith.constant 0 : index
      %c0_36 = arith.constant 0 : index
      %39 = vector.load %arg4[%c0_35, %c0_36] : memref<2x32xf32, #tpu.memory_space<vmem>>, vector<2x32xf32>
      tpu.vector_store %arg4[%c0_35, %c0_36], %38 {strides = array<i32>} : memref<2x32xf32, #tpu.memory_space<vmem>>, vector<2x32xf32>,
    } else {
    }
    return
  }
  func.func @transform_0(%arg0: i32, %arg1: i32) -> (i32, i32, i32) {
    %c0_i32 = arith.constant 0 : i32
    %c0_i32_0 = arith.constant 0 : i32
    %c0_i32_1 = arith.constant 0 : i32
    %c0_i32_2 = arith.constant 0 : i32
    return %c0_i32, %c0_i32_0, %c0_i32_1 : i32, i32, i32
  }
  func.func @transform_1(%arg0: i32, %arg1: i32) -> (i32, i32, i32) {
    %c0_i32 = arith.constant 0 : i32
    %c0_i32_0 = arith.constant 0 : i32
    return %arg0, %arg1, %c0_i32 : i32, i32, i32
  }
  func.func @transform_2(%arg0: i32, %arg1: i32) -> (i32, i32) {
    %c0_i32 = arith.constant 0 : i32
    %c0_i32_0 = arith.constant 0 : i32
    return %arg0, %c0_i32 : i32, i32
  }
}

</mosaic_0001>

<llo_original>
// kernel: tpu_custom_call.1
$region0: #{tpu_custom_call.1}
  #allocation0 [shape = 'u32[]', space=smem, size = 0x4, offset = 0x4, fixed_abs, tag = 'smem constant byte address 0x4 - core index']
  #allocation1 [shape = 'u32[72,128]{1,0:T(1,128)}', space=vmem, size = 0x9000, scoped, tag = 'internal scratch']
  #allocation2 [shape = 'f32[2,1,1]{2,1,0:T(1,128)}', space=vmem, size = 0x400, scoped, tag = 'scratch operand']
  #allocation3 [shape = 'f32[2,1,1]{2,1,0:T(1,128)}', space=vmem, size = 0x400, scoped, tag = 'scratch operand']
  #allocation4 [shape = 'f32[2,1,32]{2,1,0:T(1,128)}', space=vmem, size = 0x400, scoped, tag = 'scratch operand']
  %s0 = inlined_call_operand.hbm [shape: f32[1,1,32], index: 0, kind: input, shape index: {}]
  %s1 = inlined_call_operand.hbm [shape: f32[2,8,32], index: 1, kind: input, shape index: {}]
  %s2 = inlined_call_operand.hbm [shape: f32[2,32], index: 2, kind: output, shape index: {}]
  %s3 = sld [smem:[#allocation0]]
  $region34: #{tpu_custom_call.1} parent=0
    _
  %s5 = ssub.s32 1, %s3
  %s6 = scalar_select 0, %s5, %s3
  $region1: #{tpu_custom_call.1} parent=0
    #allocation5 [shape = 'u8[512]{0}', space=vmem, size = 0x400, scoped, tag = 'input window, operand 0, single buffered']
    #allocation6 [shape = 's32[1]{0}', space=sflag, size = 0x4, scoped, tag = 'scoped memory for tpu_custom_call.1']
    #allocation7 [shape = 's32[1]{0}', space=sflag, size = 0x4, scoped, tag = 'scoped memory for tpu_custom_call.1']
    #allocation8 [shape = 'u8[8192]{0}', space=vmem, size = 0x2000, scoped, tag = 'input window, operand 1, single buffered']
    #allocation9 [shape = 's32[1]{0}', space=sflag, size = 0x4, scoped, tag = 'scoped memory for tpu_custom_call.1']
    #allocation10 [shape = 'u8[1024]{0}', space=vmem, size = 0x400, scoped, tag = 'output window, operand 0, single buffered']
    %7 = vsyncpa [#allocation6], 0
    %8 = vsyncpa [#allocation9], 0
    %9 = vsyncpa [#allocation7], 0
    // Predicated region
    $region2: #{tpu_custom_call.1} parent=1 // pred_check
      _
    $region3: #{tpu_custom_call.1} parent=1 // pred_check_branch
      %11 = sbr.rel (0) target = $region5
    $region4: #{tpu_custom_call.1} parent=1 // pred_region
      %13 = vsyncadd [#allocation6], 0
      %s15 = sshll.u32 %s0, 4
      %s16 = int_to_ptr.hbm [resolvable:$true] %s15
      %s17 = sshll.u32 [#allocation5], 4
      %s18 = int_to_ptr.vmem [resolvable:$true] %s17
      %20 = dma.hbm_to_vmem [thread:$0]  %s16, 16, %s18, [#allocation6]
    $region5: #{tpu_custom_call.1} parent=1 // pred_fallthru
      _
    // Predicated region
    $region6: #{tpu_custom_call.1} parent=1 // pred_check
      _
    $region7: #{tpu_custom_call.1} parent=1 // pred_check_branch
      %22 = sbr.rel (0) target = $region9
    $region8: #{tpu_custom_call.1} parent=1 // pred_region
      %24 = vsyncadd [#allocation9], 0
      %s25 = sshll.u32 %s1, 4
      %s26 = int_to_ptr.hbm [resolvable:$true] %s25
      %s27 = sshll.u32 [#allocation8], 4
      %s28 = int_to_ptr.vmem [resolvable:$true] %s27
      %33 = dma.hbm_to_vmem [thread:$0]  %s26, 256, %s28, [#allocation9], 128, 128, 8
    $region9: #{tpu_custom_call.1} parent=1 // pred_fallthru
      _
    // Predicated region
    $region10: #{tpu_custom_call.1} parent=1 // pred_check
      _
    $region11: #{tpu_custom_call.1} parent=1 // pred_check_branch
      %35 = sbr.rel (0) target = $region13
    $region12: #{tpu_custom_call.1} parent=1 // pred_region
      %37 = dma.done [#allocation6], 16
    $region13: #{tpu_custom_call.1} parent=1 // pred_fallthru
      _
    // Predicated region
    $region14: #{tpu_custom_call.1} parent=1 // pred_check
      _
    $region15: #{tpu_custom_call.1} parent=1 // pred_check_branch
      %39 = sbr.rel (0) target = $region17
    $region16: #{tpu_custom_call.1} parent=1 // pred_region
      %41 = dma.done [#allocation9], 256
    $region17: #{tpu_custom_call.1} parent=1 // pred_fallthru
      _
    %p42 = scmp.eq.s32.totalorder 0, 0
    // Predicated region
    $region18: #{tpu_custom_call.1} parent=1 // pred_check
      %p43 = pneg %p42
    $region19: #{tpu_custom_call.1} parent=1 // pred_check_branch
      %45 = sbr.rel (%p43) target = $region21
    $region20: #{tpu_custom_call.1} parent=1 // pred_region
      %vm46 = vcmask 0
      %47 = vst.msk [vmem:[#allocation2] sm:$0x1] %vm46, -inf
      %48 = vst.msk [vmem:[#allocation2 + $0x1] sm:$0x1] %vm46, -inf
      %49 = vst.msk [vmem:[#allocation3] sm:$0x1] %vm46, 0.0
      %50 = vst.msk [vmem:[#allocation3 + $0x1] sm:$0x1] %vm46, 0.0
      %vm51 = vcmask 253952
      %52 = vst.msk [vmem:[#allocation4] sm:$0x1] %vm51, 0.0
      %53 = vst.msk [vmem:[#allocation4 + $0x1] sm:$0x1] %vm51, 0.0
    $region21: #{tpu_custom_call.1} parent=1 // pred_fallthru
      _
    %v54 = vld [vmem:[#allocation8] sm:$0xff]
    %v55 = vld [vmem:[#allocation8 + $0x8] sm:$0xff]
    %v56 = vld [vmem:[#allocation5] sm:$0x1]
    %vm57 = vcmask 261120
    %v59 = vsel %vm57, %v56, 0
    %v62 = vsel %vm57, %v54, 0
    %64 = vmatpush.xpose.msra.mxu0 0.0
    %65 = vmatpush.xpose.msra.mxu0 0.0
    %66 = vmatpush.xpose.msra.mxu0 0.0
    %67 = vmatpush.xpose.msra.mxu0 0.0
    %68 = vmatpush.xpose.msra.mxu0 0.0
    %69 = vmatpush.xpose.msra.mxu0 0.0
    %70 = vmatpush.xpose.msra.mxu0 0.0
    %71 = vmatpush.xpose.msra.mxu0 0.0
    %72 = vmatpush.xpose.msra.mxu0 0.0
    %73 = vmatpush.xpose.msra.mxu0 0.0
    %74 = vmatpush.xpose.msra.mxu0 0.0
    %75 = vmatpush.xpose.msra.mxu0 0.0
    %76 = vmatpush.xpose.msra.mxu0 0.0
    %77 = vmatpush.xpose.msra.mxu0 0.0
    %78 = vmatpush.xpose.msra.mxu0 0.0
    %79 = vmatpush.xpose.msra.mxu0 %v62
    %80 = vmatmul.f32.gmra.mxu0 %v59
    %v81 = vpop.f32.mrf.mxu0
    %v82 = vadd.f32 0.0, %v81
    %83 = vdwg.mxu0
    %v85 = vsel %vm57, %v55, 0
    %87 = vmatpush.xpose.msra.mxu0 0.0
    %88 = vmatpush.xpose.msra.mxu0 0.0
    %89 = vmatpush.xpose.msra.mxu0 0.0
    %90 = vmatpush.xpose.msra.mxu0 0.0
    %91 = vmatpush.xpose.msra.mxu0 0.0
    %92 = vmatpush.xpose.msra.mxu0 0.0
    %93 = vmatpush.xpose.msra.mxu0 0.0
    %94 = vmatpush.xpose.msra.mxu0 0.0
    %95 = vmatpush.xpose.msra.mxu0 0.0
    %96 = vmatpush.xpose.msra.mxu0 0.0
    %97 = vmatpush.xpose.msra.mxu0 0.0
    %98 = vmatpush.xpose.msra.mxu0 0.0
    %99 = vmatpush.xpose.msra.mxu0 0.0
    %100 = vmatpush.xpose.msra.mxu0 0.0
    %101 = vmatpush.xpose.msra.mxu0 0.0
    %102 = vmatpush.xpose.msra.mxu0 %v85
    %103 = vmatmul.f32.gmra.mxu0 %v59
    %v104 = vpop.f32.mrf.mxu0
    %v105 = vadd.f32 0.0, %v104
    %106 = vdwg.mxu0
    %v107 = vld [vmem:[#allocation2] sm:$0x1]
    %v108 = vld [vmem:[#allocation2 + $0x1] sm:$0x1]
    %vm109 = vcmask 57344
    %v110 = vsel %vm109, %v82, -inf
    %111 = vmax.xlane.f32.xlu0 %v110
    %v112 = vpop.xlane.xlu0 %111
    %v113 = vsel %vm109, %v105, -inf
    %114 = vmax.xlane.f32.xlu0 %v113
    %v115 = vpop.xlane.xlu0 %114
    %v116 = vmax.f32 %v107, %v112
    %v117 = vmax.f32 %v108, %v115
    %v118 = vsub.f32 %v107, %v116
    %v119 = vsub.f32 %v108, %v117
    %v120 = vmul.f32 %v118, 1.442695
    %v121 = vpow.pop %v120
    %v122 = vmul.f32 %v119, 1.442695
    %v123 = vpow.pop %v122
    %125 = vset.pattern.permute.xlu0 0
    %126 = vperm.xlu0 %125, %v116
    %v127 = vpop.permute.xlu0 %126
    %v129 = vperm.slane %v127, 0
    %131 = vset.pattern.permute.xlu0 0
    %132 = vperm.xlu0 %131, %v117
    %v133 = vpop.permute.xlu0 %132
    %v135 = vperm.slane %v133, 0
    %v136 = vsub.f32 %v82, %v129
    %v137 = vsub.f32 %v105, %v135
    %v138 = vmul.f32 %v136, 1.442695
    %v139 = vpow.pop %v138
    %v140 = vmul.f32 %v137, 1.442695
    %v141 = vpow.pop %v140
    %v142 = vld [vmem:[#allocation3] sm:$0x1]
    %v143 = vld [vmem:[#allocation3 + $0x1] sm:$0x1]
    %v144 = vmul.f32 %v121, %v142
    %v145 = vmul.f32 %v123, %v143
    %v146 = vsel %vm109, %v139, 0.0
    %147 = vadd.xlane.f32.xlu0 %v146
    %v148 = vpop.xlane.xlu0 %147
    %v149 = vsel %vm109, %v141, 0.0
    %150 = vadd.xlane.f32.xlu0 %v149
    %v151 = vpop.xlane.xlu0 %150
    %v152 = vadd.f32 %v144, %v148
    %v153 = vadd.f32 %v145, %v151
    %vm154 = vcmask 0
    %155 = vst.msk [vmem:[#allocation3] sm:$0x1] %vm154, %v152
    %156 = vst.msk [vmem:[#allocation3 + $0x1] sm:$0x1] %vm154, %v153
    %vm157 = vcmask 64512
    %v159 = vsel %vm157, %v139, 0
    %161 = vmatpush.msra.mxu0 0.0
    %162 = vmatpush.msra.mxu0 0.0
    %163 = vmatpush.msra.mxu0 0.0
    %164 = vmatpush.msra.mxu0 0.0
    %165 = vmatpush.msra.mxu0 0.0
    %166 = vmatpush.msra.mxu0 0.0
    %167 = vmatpush.msra.mxu0 0.0
    %168 = vmatpush.msra.mxu0 0.0
    %169 = vmatpush.msra.mxu0 0.0
    %170 = vmatpush.msra.mxu0 0.0
    %171 = vmatpush.msra.mxu0 0.0
    %172 = vmatpush.msra.mxu0 0.0
    %173 = vmatpush.msra.mxu0 0.0
    %174 = vmatpush.msra.mxu0 0.0
    %175 = vmatpush.msra.mxu0 0.0
    %176 = vmatpush.msra.mxu0 %v54
    %177 = vmatmul.f32.gmra.mxu0 %v159
    %v178 = vpop.f32.mrf.mxu0
    %v179 = vadd.f32 0.0, %v178
    %180 = vdwg.mxu0
    %v182 = vsel %vm157, %v141, 0
    %184 = vmatpush.msra.mxu0 0.0
    %185 = vmatpush.msra.mxu0 0.0
    %186 = vmatpush.msra.mxu0 0.0
    %187 = vmatpush.msra.mxu0 0.0
    %188 = vmatpush.msra.mxu0 0.0
    %189 = vmatpush.msra.mxu0 0.0
    %190 = vmatpush.msra.mxu0 0.0
    %191 = vmatpush.msra.mxu0 0.0
    %192 = vmatpush.msra.mxu0 0.0
    %193 = vmatpush.msra.mxu0 0.0
    %194 = vmatpush.msra.mxu0 0.0
    %195 = vmatpush.msra.mxu0 0.0
    %196 = vmatpush.msra.mxu0 0.0
    %197 = vmatpush.msra.mxu0 0.0
    %198 = vmatpush.msra.mxu0 0.0
    %199 = vmatpush.msra.mxu0 %v55
    %200 = vmatmul.f32.gmra.mxu0 %v182
    %v201 = vpop.f32.mrf.mxu0
    %v202 = vadd.f32 0.0, %v201
    %203 = vdwg.mxu0
    %v204 = vld [vmem:[#allocation4] sm:$0x1]
    %v205 = vld [vmem:[#allocation4 + $0x1] sm:$0x1]
    %207 = vset.pattern.permute.xlu0 0
    %208 = vperm.xlu0 %207, %v121
    %v209 = vpop.permute.xlu0 %208
    %v211 = vperm.slane %v209, 0
    %213 = vset.pattern.permute.xlu0 0
    %214 = vperm.xlu0 %213, %v123
    %v215 = vpop.permute.xlu0 %214
    %v217 = vperm.slane %v215, 0
    %v218 = vmul.f32 %v211, %v204
    %v219 = vmul.f32 %v217, %v205
    %v220 = vadd.f32 %v218, %v179
    %v221 = vadd.f32 %v219, %v202
    %vm222 = vcmask 253952
    %223 = vst.msk [vmem:[#allocation4] sm:$0x1] %vm222, %v220
    %224 = vst.msk [vmem:[#allocation4 + $0x1] sm:$0x1] %vm222, %v221
    %225 = vst.msk [vmem:[#allocation2] sm:$0x1] %vm154, %v116
    %226 = vst.msk [vmem:[#allocation2 + $0x1] sm:$0x1] %vm154, %v117
    // Predicated region
    $region22: #{tpu_custom_call.1} parent=1 // pred_check
      %p227 = pneg %p42
    $region23: #{tpu_custom_call.1} parent=1 // pred_check_branch
      %229 = sbr.rel (%p227) target = $region25
    $region24: #{tpu_custom_call.1} parent=1 // pred_region
      %v230 = vld [vmem:[#allocation3] sm:$0x1]
      %v231 = vld [vmem:[#allocation3 + $0x1] sm:$0x1]
      %v232 = vrcp.pop %v230
      %v233 = vmul.f32 %v230, %v232
      %v234 = vsub.f32 1.0, %v233
      %v235 = vmul.f32 %v232, %v234
      %v236 = vadd.f32 %v232, %v235
      %vm237 = vweird.f32 %v230
      %vm238 = vweird.f32 %v232
      %vm239 = vmor %vm237, %vm238
      %v240 = vsel %vm239, %v232, %v236
      %v241 = vand.u32 2147483647, %v230
      %vm242 = vcmp.eq.f32.partialorder %v241, 8.507059e+37
      %v243 = vand.u32 %v230, 2147483648
      %v244 = vor.u32 1.1754944e-38, %v243
      %v245 = vsel %vm242, %v244, %v240
      %v246 = vrcp.pop %v231
      %v247 = vmul.f32 %v231, %v246
      %v248 = vsub.f32 1.0, %v247
      %v249 = vmul.f32 %v246, %v248
      %v250 = vadd.f32 %v246, %v249
      %vm251 = vweird.f32 %v231
      %vm252 = vweird.f32 %v246
      %vm253 = vmor %vm251, %vm252
      %v254 = vsel %vm253, %v246, %v250
      %v255 = vand.u32 2147483647, %v231
      %vm256 = vcmp.eq.f32.partialorder %v255, 8.507059e+37
      %v257 = vand.u32 %v231, 2147483648
      %v258 = vor.u32 1.1754944e-38, %v257
      %v259 = vsel %vm256, %v258, %v254
      %v260 = vld [vmem:[#allocation4] sm:$0x1]
      %v261 = vld [vmem:[#allocation4 + $0x1] sm:$0x1]
      %263 = vset.pattern.permute.xlu0 0
      %264 = vperm.xlu0 %263, %v245
      %v265 = vpop.permute.xlu0 %264
      %v267 = vperm.slane %v265, 0
      %269 = vset.pattern.permute.xlu0 0
      %270 = vperm.xlu0 %269, %v259
      %v271 = vpop.permute.xlu0 %270
      %v273 = vperm.slane %v271, 0
      %v274 = vmul.f32 %v260, %v267
      %v275 = vmul.f32 %v261, %v273
      %278 = vst [vmem:[#allocation1] ss:$9 sm:$0xff] %v274
      %s279 = scalar_lea.vmem [#allocation1], 1
      %280 = vst [vmem:[%s279] ss:$9 sm:$0xff] %v275
      %v281 = vld [vmem:[#allocation1] sm:$0xff]
      %vm283 = vcmask 254976
      %284 = vst.msk [vmem:[#allocation10] sm:$0x3] %vm283, %v281
    $region25: #{tpu_custom_call.1} parent=1 // pred_fallthru
      _
    // Predicated region
    $region26: #{tpu_custom_call.1} parent=1 // pred_check
      _
    $region27: #{tpu_custom_call.1} parent=1 // pred_check_branch
      %286 = sbr.rel (0) target = $region29
    $region28: #{tpu_custom_call.1} parent=1 // pred_region
      %288 = vsyncadd [#allocation7], 0
      %s290 = sshll.u32 [#allocation10], 4
      %s291 = int_to_ptr.vmem [resolvable:$true] %s290
      %s292 = sshll.u32 %s2, 4
      %s293 = int_to_ptr.hbm [resolvable:$true] %s292
      %295 = dma.vmem_to_hbm [thread:$0]  %s291, 32, %s293, [#allocation7]
    $region29: #{tpu_custom_call.1} parent=1 // pred_fallthru
      _
    // Predicated region
    $region30: #{tpu_custom_call.1} parent=1 // pred_check
      _
    $region31: #{tpu_custom_call.1} parent=1 // pred_check_branch
      %297 = sbr.rel (0) target = $region33
    $region32: #{tpu_custom_call.1} parent=1 // pred_region
      %299 = dma.done [#allocation7], 32
    $region33: #{tpu_custom_call.1} parent=1 // pred_fallthru
      _
    %300 = vsyncpa [#allocation6], 1
    %301 = vsyncpa [#allocation9], 1
    %302 = vsyncpa [#allocation7], 1

</llo_original>
